<compile_context>
chip_gen: v5e
topology: v5e:2x2
jax: 0.10.0
libtpu: 0.0.40
codegen_flags: <defaults>
</compile_context>

<pallas_src>
import numpy as np
import jax
import jax.numpy as jnp
from jax import lax
from jax.experimental import pallas as pl
from jax.experimental.pallas import tpu as pltpu


# ----------------------------- kernels ------------------------------------ #

def _gather_pair(edge_ref, zs, zt, te, n):
    """Gather zs[src].T and zt[tar].T as (D, TE) f32 via one-hot MXU matmuls.

    The iota / compare path stays int32 -> f32 (v5e has no bf16 VPU); only the
    final one-hot operand is cast to bf16 for the MXU (exact 0/1 values).
    """
    iota = lax.broadcasted_iota(jnp.int32, (n, te), 0)                     # (N, TE)
    oh_s = (iota == edge_ref[0:1, :]).astype(jnp.float32).astype(jnp.bfloat16)
    oh_t = (iota == edge_ref[1:2, :]).astype(jnp.float32).astype(jnp.bfloat16)
    dims = (((0,), (0,)), ((), ()))
    hs = lax.dot_general(zs, oh_s, dims, preferred_element_type=jnp.float32)  # (D, TE)
    ht = lax.dot_general(zt, oh_t, dims, preferred_element_type=jnp.float32)  # (D, TE)
    return hs, ht


def _mlp_mul_kernel(edge_ref, zs_ref, zt_ref, w1t_ref, b1_ref, w2_ref, b2_ref,
                    out_ref):
    te = out_ref.shape[1]
    n = zs_ref.shape[0]
    hs, ht = _gather_pair(edge_ref, zs_ref[...], zt_ref[...], te, n)      # (D, TE)
    h = (hs * ht).astype(jnp.bfloat16)                                    # 'MUL' fusion
    h = jnp.dot(w1t_ref[...], h,
                preferred_element_type=jnp.float32) + b1_ref[...]         # (D, TE) f32
    h = jnp.maximum(h, 0.0)
    # Dropout is identity (inference mode).
    # W2 as VPU multiply + sublane reduce -> lane-dense (1, TE) logit row.
    logit = jnp.sum(h * w2_ref[...], axis=0, keepdims=True) + b2_ref[...]
    out_ref[...] = jax.nn.sigmoid(logit)


def _mlp_cat_kernel(edge_ref, ps_ref, pt_ref, b1_ref, w2_ref, b2_ref, out_ref):
    # 'CAT' fusion with the W1 projection hoisted per node (done in wrapper).
    te = out_ref.shape[1]
    n = ps_ref.shape[0]
    hs, ht = _gather_pair(edge_ref, ps_ref[...], pt_ref[...], te, n)      # (D, TE)
    h = jnp.maximum(hs + ht + b1_ref[...], 0.0)
    # Dropout is identity (inference mode).
    logit = jnp.sum(h * w2_ref[...], axis=0, keepdims=True) + b2_ref[...]
    out_ref[...] = jax.nn.sigmoid(logit)


def _ipd_kernel(edge_ref, zs_ref, zt_ref, out_ref):
    te = out_ref.shape[1]
    n = zs_ref.shape[0]
    hs, ht = _gather_pair(edge_ref, zs_ref[...], zt_ref[...], te, n)      # (D, TE)
    out_ref[...] = jax.nn.sigmoid(jnp.sum(hs * ht, axis=0, keepdims=True))


# ----------------------------- wrapper ------------------------------------ #

def _round_up(x, m):
    return (x + m - 1) // m * m


def my_decoder_forward(params, z_src, z_tar, edge_index, decoder_type,
                       *, edge_tile=512):
    """Pallas implementation of MyDecoder.forward(z_src, z_tar, edge_index)."""
    N, D = z_src.shape
    E = edge_index.shape[1]
    edge_index = edge_index.astype(jnp.int32)

    # Clamp tile for small problems; pad ragged E with dummy edges (node 0),
    # extra outputs are sliced off at the end.
    edge_tile = max(128, min(edge_tile, _round_up(E, 128)))
    E_pad = _round_up(E, edge_tile)
    if E_pad != E:
        pad = jnp.zeros((2, E_pad - E), edge_index.dtype)
        edge_index = jnp.concatenate([edge_index, pad], axis=1)
    grid = (E_pad // edge_tile,)

    def full_spec(shape):
        # Grid-invariant block: resident in VMEM, never re-fetched.
        return pl.BlockSpec(shape, lambda i, _n=len(shape): (0,) * _n)

    edge_spec = pl.BlockSpec((2, edge_tile), lambda i: (0, i))
    out_spec = pl.BlockSpec((1, edge_tile), lambda i: (0, i))     # lane-dense

    if decoder_type == 'MUL':
        kernel = _mlp_mul_kernel
        weight_args = (
            z_src.astype(jnp.bfloat16),                           # (N, D)
            z_tar.astype(jnp.bfloat16),                           # (N, D)
            params['w1'].T.astype(jnp.bfloat16),                  # (D, D)  W1^T
            params['b1'].reshape(D, 1).astype(jnp.float32),       # (D, 1)
            params['w2'].reshape(D, 1).astype(jnp.float32),       # (D, 1)
            params['b2'].reshape(1, 1).astype(jnp.float32),       # (1, 1)
        )
    elif decoder_type == 'CAT':
        kernel = _mlp_cat_kernel
        w1 = params['w1']                                         # (2D, D)
        # Hoist the W1 projection per node (f32 matmul in the wrapper).
        p_src = (z_src @ w1[:D]).astype(jnp.bfloat16)             # (N, D)
        p_tar = (z_tar @ w1[D:]).astype(jnp.bfloat16)             # (N, D)
        weight_args = (
            p_src, p_tar,
            params['b1'].reshape(D, 1).astype(jnp.float32),       # (D, 1)
            params['w2'].reshape(D, 1).astype(jnp.float32),       # (D, 1)
            params['b2'].reshape(1, 1).astype(jnp.float32),       # (1, 1)
        )
    elif decoder_type == 'IPD':
        kernel = _ipd_kernel
        weight_args = (z_src.astype(jnp.bfloat16), z_tar.astype(jnp.bfloat16))
    else:
        raise Exception('Decoder type error')

    in_specs = [edge_spec] + [full_spec(tuple(a.shape)) for a in weight_args]

    out = pl.pallas_call(
        kernel,
        out_shape=jax.ShapeDtypeStruct((1, E_pad), jnp.float32),
        grid_spec=pltpu.PrefetchScalarGridSpec(
            num_scalar_prefetch=0,
            grid=grid,
            in_specs=in_specs,
            out_specs=out_spec,
        ),
        compiler_params=pltpu.CompilerParams(
            dimension_semantics=("parallel",),
            vmem_limit_bytes=32 * 1024 * 1024,
        ),
    )(edge_index, *weight_args)
    return out[0, :E]


# --------------------------- reference (plain JAX) ------------------------- #

def reference_forward(params, z_src, z_tar, edge_index, decoder_type):
    hs = z_src[edge_index[0]]
    ht = z_tar[edge_index[1]]
    if decoder_type == 'IPD':
        return jax.nn.sigmoid(jnp.sum(hs * ht, axis=-1))
    h = hs * ht if decoder_type == 'MUL' else jnp.concatenate([hs, ht], -1)
    h = jnp.maximum(h @ params['w1'] + params['b1'], 0.0)
    return jax.nn.sigmoid(h @ params['w2'] + params['b2'])[:, 0]


# ------------------------------ main --------------------------------------- #

def init_params(key, emb_dim, decoder_type):
    """Deterministic synthetic init mirroring MLPDecoder's Linear shapes."""
    if decoder_type == 'IPD':
        return {}
    d_in = 2 * emb_dim if decoder_type == 'CAT' else emb_dim
    k1, k2 = jax.random.split(key)
    return {
        'w1': jax.random.normal(k1, (d_in, emb_dim), jnp.float32) / np.sqrt(d_in),
        'b1': jnp.zeros((1, emb_dim), jnp.float32),
        'w2': jax.random.normal(k2, (emb_dim, 1), jnp.float32) / np.sqrt(emb_dim),
        'b2': jnp.zeros((1, 1), jnp.float32),
    }


if __name__ == "__main__":
    key = jax.random.PRNGKey(0)
    N, D, E = 16, 32, 256   # nodes, emb_dim, edges

    kz1, kz2, ke, kp = jax.random.split(key, 4)
    z_src = jax.random.normal(kz1, (N, D), jnp.float32)
    z_tar = jax.random.normal(kz2, (N, D), jnp.float32)
    edge_index = jax.random.randint(ke, (2, E), 0, N, dtype=jnp.int32)

    for decoder_type in ('CAT', 'MUL', 'IPD'):
        params = init_params(kp, D, decoder_type)
        out = my_decoder_forward(params, z_src, z_tar, edge_index, decoder_type)
        out = jax.block_until_ready(out)
        ref = reference_forward(params, z_src, z_tar, edge_index, decoder_type)
        # bf16 MXU operands -> loosened tolerance vs. the pure-f32 reference.
        np.testing.assert_allclose(np.asarray(out), np.asarray(ref),
                                   rtol=3e-2, atol=3e-2)

    print("KERNEL_OK")
</pallas_src>

<mosaic_0001>
module attributes {stable_mosaic.version = 11 : i64} {
  func.func @_mlp_cat_kernel(%arg0: i32, %arg1: memref<2x256xi32, #tpu.memory_space<vmem>>, %arg2: memref<16x32xbf16, #tpu.memory_space<vmem>>, %arg3: memref<16x32xbf16, #tpu.memory_space<vmem>>, %arg4: memref<32x1xf32, #tpu.memory_space<vmem>>, %arg5: memref<32x1xf32, #tpu.memory_space<vmem>>, %arg6: memref<1x1xf32, #tpu.memory_space<vmem>>, %arg7: memref<1x256xf32, #tpu.memory_space<vmem>>) attributes {dimension_semantics = [#tpu.dimension_semantics<parallel>], iteration_bounds = array<i64: 1>, scalar_prefetch = 0 : i64, scratch_operands = 0 : i64, tpu.core_type = #tpu.core_type<tc>, window_params = [{transform_indices = @transform_0, window_bounds = array<i64: 2, 256>}, {pipeline_mode = #tpu.pipeline_mode<synchronous>, transform_indices = @transform_1, window_bounds = array<i64: 16, 32>}, {pipeline_mode = #tpu.pipeline_mode<synchronous>, transform_indices = @transform_2, window_bounds = array<i64: 16, 32>}, {pipeline_mode = #tpu.pipeline_mode<synchronous>, transform_indices = @transform_3, window_bounds = array<i64: 32, 1>}, {pipeline_mode = #tpu.pipeline_mode<synchronous>, transform_indices = @transform_4, window_bounds = array<i64: 32, 1>}, {pipeline_mode = #tpu.pipeline_mode<synchronous>, transform_indices = @transform_5, window_bounds = array<i64: 1, 1>}, {transform_indices = @transform_6, window_bounds = array<i64: 1, 256>}]} {
    %c0 = arith.constant 0 : index
    %c0_0 = arith.constant 0 : index
    %0 = vector.load %arg2[%c0, %c0_0] : memref<16x32xbf16, #tpu.memory_space<vmem>>, vector<16x32xbf16>
    %c0_1 = arith.constant 0 : index
    %c0_2 = arith.constant 0 : index
    %1 = vector.load %arg3[%c0_1, %c0_2] : memref<16x32xbf16, #tpu.memory_space<vmem>>, vector<16x32xbf16>
    %2 = tpu.iota {dimensions = array<i32: 0>} : vector<16x256xi32>
    %c0_3 = arith.constant 0 : index
    %c0_4 = arith.constant 0 : index
    %3 = vector.load %arg1[%c0_3, %c0_4] : memref<2x256xi32, #tpu.memory_space<vmem>>, vector<1x256xi32>
    %4 = vector.broadcast %3 : vector<1x256xi32> to vector<16x256xi32>
    %5 = arith.cmpi eq, %2, %4 : vector<16x256xi32>
    %6 = arith.extui %5 : vector<16x256xi1> to vector<16x256xi32>
    %7 = arith.sitofp %6 : vector<16x256xi32> to vector<16x256xf32>
    %8 = arith.truncf %7 : vector<16x256xf32> to vector<16x256xbf16>
    %c1 = arith.constant 1 : index
    %c0_5 = arith.constant 0 : index
    %9 = vector.load %arg1[%c1, %c0_5] : memref<2x256xi32, #tpu.memory_space<vmem>>, vector<1x256xi32>
    %10 = vector.broadcast %9 : vector<1x256xi32> to vector<16x256xi32>
    %11 = arith.cmpi eq, %2, %10 : vector<16x256xi32>
    %12 = arith.extui %11 : vector<16x256xi1> to vector<16x256xi32>
    %13 = arith.sitofp %12 : vector<16x256xi32> to vector<16x256xf32>
    %14 = arith.truncf %13 : vector<16x256xf32> to vector<16x256xbf16>
    %cst = arith.constant dense<0.000000e+00> : vector<32x256xf32>
    %15 = tpu.matmul %0, %8, %cst {dimension_numbers = #tpu.dot_dimension_numbers<[0], [0], [1], [1], [0, 1, 1, 1], [], []>} : vector<16x32xbf16>, vector<16x256xbf16>, vector<32x256xf32> -> vector<32x256xf32>
    %cst_6 = arith.constant dense<0.000000e+00> : vector<32x256xf32>
    %16 = tpu.matmul %1, %14, %cst_6 {dimension_numbers = #tpu.dot_dimension_numbers<[0], [0], [1], [1], [0, 1, 1, 1], [], []>} : vector<16x32xbf16>, vector<16x256xbf16>, vector<32x256xf32> -> vector<32x256xf32>
    %17 = arith.addf %15, %16 : vector<32x256xf32>
    %c0_7 = arith.constant 0 : index
    %c0_8 = arith.constant 0 : index
    %18 = vector.load %arg4[%c0_7, %c0_8] : memref<32x1xf32, #tpu.memory_space<vmem>>, vector<32x1xf32>
    %19 = vector.broadcast %18 : vector<32x1xf32> to vector<32x256xf32>
    %20 = arith.addf %17, %19 : vector<32x256xf32>
    %cst_9 = arith.constant 0.000000e+00 : f32
    %21 = vector.broadcast %cst_9 : f32 to vector<32x256xf32>
    %22 = arith.maximumf %20, %21 : vector<32x256xf32>
    %c0_10 = arith.constant 0 : index
    %c0_11 = arith.constant 0 : index
    %23 = vector.load %arg5[%c0_10, %c0_11] : memref<32x1xf32, #tpu.memory_space<vmem>>, vector<32x1xf32>
    %24 = vector.broadcast %23 : vector<32x1xf32> to vector<32x256xf32>
    %25 = arith.mulf %22, %24 : vector<32x256xf32>
    %cst_12 = arith.constant dense<0.000000e+00> : vector<256xf32>
    %26 = vector.multi_reduction <add>, %25, %cst_12 [0] : vector<32x256xf32> to vector<256xf32>
    %27 = vector.shape_cast %26 : vector<256xf32> to vector<1x256xf32>
    %c0_13 = arith.constant 0 : index
    %c0_14 = arith.constant 0 : index
    %28 = vector.load %arg6[%c0_13, %c0_14] : memref<1x1xf32, #tpu.memory_space<vmem>>, vector<1x1xf32>
    %29 = vector.broadcast %28 : vector<1x1xf32> to vector<1x256xf32>
    %30 = arith.addf %27, %29 : vector<1x256xf32>
    %31 = arith.negf %30 : vector<1x256xf32>
    %32 = math.exp %31 : vector<1x256xf32>
    %cst_15 = arith.constant 1.000000e+00 : f32
    %33 = vector.broadcast %cst_15 : f32 to vector<1x256xf32>
    %34 = arith.addf %33, %32 : vector<1x256xf32>
    %35 = arith.divf %33, %34 : vector<1x256xf32>
    %c0_16 = arith.constant 0 : index
    %c0_17 = arith.constant 0 : index
    %36 = vector.load %arg7[%c0_16, %c0_17] : memref<1x256xf32, #tpu.memory_space<vmem>>, vector<1x256xf32>
    tpu.vector_store %arg7[%c0_16, %c0_17], %35 {strides = array<i32>} : memref<1x256xf32, #tpu.memory_space<vmem>>, vector<1x256xf32>,
    return
  }
  func.func @transform_0(%arg0: i32) -> (i32, i32) {
    %c0_i32 = arith.constant 0 : i32
    %c0_i32_0 = arith.constant 0 : i32
    return %c0_i32, %arg0 : i32, i32
  }
  func.func @transform_1(%arg0: i32) -> (i32, i32) {
    %c0_i32 = arith.constant 0 : i32
    %c0_i32_0 = arith.constant 0 : i32
    %c0_i32_1 = arith.constant 0 : i32
    return %c0_i32, %c0_i32_0 : i32, i32
  }
  func.func @transform_2(%arg0: i32) -> (i32, i32) {
    %c0_i32 = arith.constant 0 : i32
    %c0_i32_0 = arith.constant 0 : i32
    %c0_i32_1 = arith.constant 0 : i32
    return %c0_i32, %c0_i32_0 : i32, i32
  }
  func.func @transform_3(%arg0: i32) -> (i32, i32) {
    %c0_i32 = arith.constant 0 : i32
    %c0_i32_0 = arith.constant 0 : i32
    %c0_i32_1 = arith.constant 0 : i32
    return %c0_i32, %c0_i32_0 : i32, i32
  }
  func.func @transform_4(%arg0: i32) -> (i32, i32) {
    %c0_i32 = arith.constant 0 : i32
    %c0_i32_0 = arith.constant 0 : i32
    %c0_i32_1 = arith.constant 0 : i32
    return %c0_i32, %c0_i32_0 : i32, i32
  }
  func.func @transform_5(%arg0: i32) -> (i32, i32) {
    %c0_i32 = arith.constant 0 : i32
    %c0_i32_0 = arith.constant 0 : i32
    %c0_i32_1 = arith.constant 0 : i32
    return %c0_i32, %c0_i32_0 : i32, i32
  }
  func.func @transform_6(%arg0: i32) -> (i32, i32) {
    %c0_i32 = arith.constant 0 : i32
    %c0_i32_0 = arith.constant 0 : i32
    return %c0_i32, %arg0 : i32, i32
  }
}

</mosaic_0001>

<llo_original>
// kernel: tpu_custom_call.1
$region0: #{tpu_custom_call.1}
  #allocation0 [shape = 'u32[]', space=smem, size = 0x4, offset = 0x4, fixed_abs, tag = 'smem constant byte address 0x4 - core index']
  #allocation1 [shape = 'u32[72,128]{1,0:T(1,128)}', space=vmem, size = 0x9000, scoped, tag = 'internal scratch']
  #allocation2 [shape = 'f32[1,1]{1,0:T(1,128)S(1)}', space=vmem, size = 0x200, scoped, tag = 'scoped memory for tpu_custom_call.1']
  %s0 = inlined_call_operand.vmem [shape: s32[2,256], index: 0, kind: input, shape index: {}]
  %s1 = inlined_call_operand.vmem [shape: bf16[16,32], index: 1, kind: input, shape index: {}]
  %s2 = inlined_call_operand.vmem [shape: bf16[16,32], index: 2, kind: input, shape index: {}]
  %s3 = inlined_call_operand.vmem [shape: f32[32,1], index: 3, kind: input, shape index: {}]
  %s4 = inlined_call_operand.vmem [shape: f32[32,1], index: 4, kind: input, shape index: {}]
  %s5 = inlined_call_operand.<no memory space> [shape: f32[1,1], index: 5, kind: input, shape index: {}]
  %s6 = inlined_call_operand.hbm [shape: f32[1,256], index: 6, kind: output, shape index: {}]
  %s7 = sld [smem:[#allocation0]]
  $region34: #{tpu_custom_call.1} parent=0
    _
  %s9 = ssub.s32 1, %s7
  %s10 = scalar_select 0, %s9, %s7
  %v11 = vstv %s5
  %12 = vst [vmem:[#allocation2] sm:$0x1] %v11
  $region1: #{tpu_custom_call.1} parent=0
    #allocation3 [shape = 'u8[1024]{0}', space=vmem, size = 0x400, scoped, tag = 'output window, operand 0, single buffered']
    #allocation4 [shape = 's32[1]{0}', space=sflag, size = 0x4, scoped, tag = 'scoped memory for tpu_custom_call.1']
    %13 = vsyncpa [#allocation4], 0
    // Predicated region
    $region2: #{tpu_custom_call.1} parent=1 // pred_check
      _
    $region3: #{tpu_custom_call.1} parent=1 // pred_check_branch
      %15 = sbr.rel (0) target = $region5
    $region4: #{tpu_custom_call.1} parent=1 // pred_region
      _
    $region5: #{tpu_custom_call.1} parent=1 // pred_fallthru
      _
    // Predicated region
    $region6: #{tpu_custom_call.1} parent=1 // pred_check
      _
    $region7: #{tpu_custom_call.1} parent=1 // pred_check_branch
      %17 = sbr.rel (0) target = $region9
    $region8: #{tpu_custom_call.1} parent=1 // pred_region
      _
    $region9: #{tpu_custom_call.1} parent=1 // pred_fallthru
      _
    // Predicated region
    $region10: #{tpu_custom_call.1} parent=1 // pred_check
      _
    $region11: #{tpu_custom_call.1} parent=1 // pred_check_branch
      %19 = sbr.rel (0) target = $region13
    $region12: #{tpu_custom_call.1} parent=1 // pred_region
      _
    $region13: #{tpu_custom_call.1} parent=1 // pred_fallthru
      _
    // Predicated region
    $region14: #{tpu_custom_call.1} parent=1 // pred_check
      _
    $region15: #{tpu_custom_call.1} parent=1 // pred_check_branch
      %21 = sbr.rel (0) target = $region17
    $region16: #{tpu_custom_call.1} parent=1 // pred_region
      _
    $region17: #{tpu_custom_call.1} parent=1 // pred_fallthru
      _
    // Predicated region
    $region18: #{tpu_custom_call.1} parent=1 // pred_check
      _
    $region19: #{tpu_custom_call.1} parent=1 // pred_check_branch
      %23 = sbr.rel (0) target = $region21
    $region20: #{tpu_custom_call.1} parent=1 // pred_region
      _
    $region21: #{tpu_custom_call.1} parent=1 // pred_fallthru
      _
    // Predicated region
    $region22: #{tpu_custom_call.1} parent=1 // pred_check
      _
    $region23: #{tpu_custom_call.1} parent=1 // pred_check_branch
      %25 = sbr.rel (0) target = $region25
    $region24: #{tpu_custom_call.1} parent=1 // pred_region
      _
    $region25: #{tpu_custom_call.1} parent=1 // pred_fallthru
      _
    %v27 = vld [vmem:[%s1] sm:$0xf]
    %v28 = vld [vmem:[%s1 + $0x4] sm:$0xf]
    %v29 = vld [vmem:[%s2] sm:$0xf]
    %v30 = vld [vmem:[%s2 + $0x4] sm:$0xf]
    %v31 = vlaneseq
    %v32 = vshrl.u32 %v31, 7
    %v33 = vadd.s32 %v32, 8
    %v34 = vld [vmem:[%s0] ss:$2 sm:$0x3]
    %v35 = vperm.slane %v34, 0
    %v36 = vperm.slane %v34, 1
    %vm37 = vcmp.eq.s32.totalorder %v32, %v35
    %vm38 = vcmp.eq.s32.totalorder %v32, %v36
    %vm39 = vcmp.eq.s32.totalorder %v33, %v35
    %vm40 = vcmp.eq.s32.totalorder %v33, %v36
    %v41 = vsel %vm37, 1, 0
    %v42 = vsel %vm38, 1, 0
    %v43 = vsel %vm39, 1, 0
    %v44 = vsel %vm40, 1, 0
    %v45 = vcvt.s32.f32 %v41
    %v46 = vcvt.s32.f32 %v42
    %v47 = vcvt.s32.f32 %v43
    %v48 = vcvt.s32.f32 %v44
    %v49 = vpack.c.bf16 %v47, %v45
    %v50 = vpack.c.bf16 %v48, %v46
    %s51 = scalar_lea.vmem %s0, 1
    %v52 = vld [vmem:[%s51] ss:$2 sm:$0x3]
    %v53 = vperm.slane %v52, 0
    %v54 = vperm.slane %v52, 1
    %vm55 = vcmp.eq.s32.totalorder %v32, %v53
    %vm56 = vcmp.eq.s32.totalorder %v32, %v54
    %vm57 = vcmp.eq.s32.totalorder %v33, %v53
    %vm58 = vcmp.eq.s32.totalorder %v33, %v54
    %v59 = vsel %vm55, 1, 0
    %v60 = vsel %vm56, 1, 0
    %v61 = vsel %vm57, 1, 0
    %v62 = vsel %vm58, 1, 0
    %v63 = vcvt.s32.f32 %v59
    %v64 = vcvt.s32.f32 %v60
    %v65 = vcvt.s32.f32 %v61
    %v66 = vcvt.s32.f32 %v62
    %v67 = vpack.c.bf16 %v65, %v63
    %v68 = vpack.c.bf16 %v66, %v64
    %v71 = vunpack.c.l.b16 %v29
    %v72 = vunpack.c.l.b16 %v30
    %v73 = vpack.c.b16 %v72, %v71
    %75 = vxpose.xlu0.c.b16.start [1/8] %v73, 128
    %76 = vxpose.xlu0.c.b16.cont [2/8] 0, 128
    %77 = vxpose.xlu0.c.b16.cont [3/8] 0, 128
    %78 = vxpose.xlu0.c.b16.cont [4/8] 0, 128
    %79 = vxpose.xlu0.c.b16.cont [5/8] 0, 128
    %80 = vxpose.xlu0.c.b16.cont [6/8] 0, 128
    %81 = vxpose.xlu0.c.b16.cont [7/8] 0, 128
    %82 = vxpose.xlu0.c.b16.end [8/8] 0, 128
    %v83 = vpop.trf.xlu0
    %v84 = vpop.trf.xlu0
    %v85 = vpop.trf.xlu0
    %v86 = vpop.trf.xlu0
    %v87 = vpop.trf.xlu0
    %v88 = vpop.trf.xlu0
    %v89 = vpop.trf.xlu0
    %v90 = vpop.trf.xlu0
    %vm91 = vcmask 130048
    %v93 = vsel %vm91, %v83, 0
    %v96 = vsel %vm91, %v84, 0
    %98 = vmatpush.bf16.msra.mxu0 0
    %99 = vmatpush.bf16.msra.mxu0 0
    %100 = vmatpush.bf16.msra.mxu0 0
    %101 = vmatpush.bf16.msra.mxu0 0
    %102 = vmatpush.bf16.msra.mxu0 0
    %103 = vmatpush.bf16.msra.mxu0 0
    %104 = vmatpush.bf16.msra.mxu0 0
    %105 = vmatpush.bf16.msra.mxu0 %v67
    %106 = vmatmul.bf16.gmra.mxu0 %v93
    %v107 = vpop.f32.mrf.mxu0
    %v108 = vadd.f32 0.0, %v107
    %v109 = vpop.f32.mrf.mxu0
    %v110 = vadd.f32 0.0, %v109
    %111 = vmatmul.bf16.gmra.mxu0 %v96
    %v112 = vpop.f32.mrf.mxu0
    %v113 = vadd.f32 0.0, %v112
    %v114 = vpop.f32.mrf.mxu0
    %v115 = vadd.f32 0.0, %v114
    %116 = vdwg.mxu0
    %117 = vmatpush.bf16.msra.mxu0 0
    %118 = vmatpush.bf16.msra.mxu0 0
    %119 = vmatpush.bf16.msra.mxu0 0
    %120 = vmatpush.bf16.msra.mxu0 0
    %121 = vmatpush.bf16.msra.mxu0 0
    %122 = vmatpush.bf16.msra.mxu0 0
    %123 = vmatpush.bf16.msra.mxu0 0
    %124 = vmatpush.bf16.msra.mxu0 %v68
    %125 = vmatmul.bf16.gmra.mxu0 %v93
    %v126 = vpop.f32.mrf.mxu0
    %v127 = vadd.f32 0.0, %v126
    %v128 = vpop.f32.mrf.mxu0
    %v129 = vadd.f32 0.0, %v128
    %130 = vmatmul.bf16.gmra.mxu0 %v96
    %v131 = vpop.f32.mrf.mxu0
    %v132 = vadd.f32 0.0, %v131
    %v133 = vpop.f32.mrf.mxu0
    %v134 = vadd.f32 0.0, %v133
    %135 = vdwg.mxu0
    %v138 = vunpack.c.l.b16 %v27
    %v139 = vunpack.c.l.b16 %v28
    %v140 = vpack.c.b16 %v139, %v138
    %142 = vxpose.xlu0.c.b16.start [1/8] %v140, 128
    %143 = vxpose.xlu0.c.b16.cont [2/8] 0, 128
    %144 = vxpose.xlu0.c.b16.cont [3/8] 0, 128
    %145 = vxpose.xlu0.c.b16.cont [4/8] 0, 128
    %146 = vxpose.xlu0.c.b16.cont [5/8] 0, 128
    %147 = vxpose.xlu0.c.b16.cont [6/8] 0, 128
    %148 = vxpose.xlu0.c.b16.cont [7/8] 0, 128
    %149 = vxpose.xlu0.c.b16.end [8/8] 0, 128
    %v150 = vpop.trf.xlu0
    %v151 = vpop.trf.xlu0
    %v152 = vpop.trf.xlu0
    %v153 = vpop.trf.xlu0
    %v154 = vpop.trf.xlu0
    %v155 = vpop.trf.xlu0
    %v156 = vpop.trf.xlu0
    %v157 = vpop.trf.xlu0
    %v159 = vsel %vm91, %v150, 0
    %v162 = vsel %vm91, %v151, 0
    %164 = vmatpush.bf16.msra.mxu0 0
    %165 = vmatpush.bf16.msra.mxu0 0
    %166 = vmatpush.bf16.msra.mxu0 0
    %167 = vmatpush.bf16.msra.mxu0 0
    %168 = vmatpush.bf16.msra.mxu0 0
    %169 = vmatpush.bf16.msra.mxu0 0
    %170 = vmatpush.bf16.msra.mxu0 0
    %171 = vmatpush.bf16.msra.mxu0 %v49
    %172 = vmatmul.bf16.gmra.mxu0 %v159
    %v173 = vpop.f32.mrf.mxu0
    %v174 = vadd.f32 %v108, %v173
    %v175 = vpop.f32.mrf.mxu0
    %v176 = vadd.f32 %v110, %v175
    %177 = vmatmul.bf16.gmra.mxu0 %v162
    %v178 = vpop.f32.mrf.mxu0
    %v179 = vadd.f32 %v113, %v178
    %v180 = vpop.f32.mrf.mxu0
    %v181 = vadd.f32 %v115, %v180
    %182 = vdwg.mxu0
    %183 = vmatpush.bf16.msra.mxu0 0
    %184 = vmatpush.bf16.msra.mxu0 0
    %185 = vmatpush.bf16.msra.mxu0 0
    %186 = vmatpush.bf16.msra.mxu0 0
    %187 = vmatpush.bf16.msra.mxu0 0
    %188 = vmatpush.bf16.msra.mxu0 0
    %189 = vmatpush.bf16.msra.mxu0 0
    %190 = vmatpush.bf16.msra.mxu0 %v50
    %191 = vmatmul.bf16.gmra.mxu0 %v159
    %v192 = vpop.f32.mrf.mxu0
    %v193 = vadd.f32 %v127, %v192
    %v194 = vpop.f32.mrf.mxu0
    %v195 = vadd.f32 %v129, %v194
    %196 = vmatmul.bf16.gmra.mxu0 %v162
    %v197 = vpop.f32.mrf.mxu0
    %v198 = vadd.f32 %v132, %v197
    %v199 = vpop.f32.mrf.mxu0
    %v200 = vadd.f32 %v134, %v199
    %201 = vdwg.mxu0
    %v202 = vld [vmem:[%s3] sm:$0xff]
    %v203 = vld [vmem:[%s3 + $0x8] sm:$0xff]
    %v204 = vld [vmem:[%s3 + $0x10] sm:$0xff]
    %v205 = vld [vmem:[%s3 + $0x18] sm:$0xff]
    %207 = vset.pattern.permute.xlu0 0
    %208 = vperm.xlu0 %207, %v202
    %v209 = vpop.permute.xlu0 %208
    %212 = vset.pattern.permute.xlu0 0
    %213 = vperm.xlu0 %212, %v203
    %v214 = vpop.permute.xlu0 %213
    %217 = vset.pattern.permute.xlu0 0
    %218 = vperm.xlu0 %217, %v204
    %v219 = vpop.permute.xlu0 %218
    %222 = vset.pattern.permute.xlu0 0
    %223 = vperm.xlu0 %222, %v205
    %v224 = vpop.permute.xlu0 %223
    %v226 = vadd.f32 %v174, %v209
    %v227 = vadd.f32 %v193, %v209
    %v228 = vadd.f32 %v176, %v214
    %v229 = vadd.f32 %v195, %v214
    %v230 = vadd.f32 %v179, %v219
    %v231 = vadd.f32 %v198, %v219
    %v232 = vadd.f32 %v181, %v224
    %v233 = vadd.f32 %v200, %v224
    %v234 = vmax.f32 %v226, 0.0
    %v235 = vmax.f32 %v227, 0.0
    %v236 = vmax.f32 %v228, 0.0
    %v237 = vmax.f32 %v229, 0.0
    %v238 = vmax.f32 %v230, 0.0
    %v239 = vmax.f32 %v231, 0.0
    %v240 = vmax.f32 %v232, 0.0
    %v241 = vmax.f32 %v233, 0.0
    %v242 = vld [vmem:[%s4] sm:$0xff]
    %v243 = vld [vmem:[%s4 + $0x8] sm:$0xff]
    %v244 = vld [vmem:[%s4 + $0x10] sm:$0xff]
    %v245 = vld [vmem:[%s4 + $0x18] sm:$0xff]
    %247 = vset.pattern.permute.xlu0 0
    %248 = vperm.xlu0 %247, %v242
    %v249 = vpop.permute.xlu0 %248
    %252 = vset.pattern.permute.xlu0 0
    %253 = vperm.xlu0 %252, %v243
    %v254 = vpop.permute.xlu0 %253
    %257 = vset.pattern.permute.xlu0 0
    %258 = vperm.xlu0 %257, %v244
    %v259 = vpop.permute.xlu0 %258
    %262 = vset.pattern.permute.xlu0 0
    %263 = vperm.xlu0 %262, %v245
    %v264 = vpop.permute.xlu0 %263
    %v266 = vmul.f32 %v234, %v249
    %v267 = vmul.f32 %v235, %v249
    %v268 = vmul.f32 %v236, %v254
    %v269 = vmul.f32 %v237, %v254
    %v270 = vmul.f32 %v238, %v259
    %v271 = vmul.f32 %v239, %v259
    %v272 = vmul.f32 %v240, %v264
    %v273 = vmul.f32 %v241, %v264
    %v274 = vadd.f32 %v266, %v268
    %v275 = vadd.f32 %v274, %v270
    %v276 = vadd.f32 %v275, %v272
    %v277 = vrot.slane %v276, 4
    %v278 = vadd.f32 %v276, %v277
    %v279 = vrot.slane %v278, 2
    %v280 = vadd.f32 %v278, %v279
    %v281 = vrot.slane %v280, 1
    %v282 = vadd.f32 %v280, %v281
    %v283 = vadd.f32 %v267, %v269
    %v284 = vadd.f32 %v283, %v271
    %v285 = vadd.f32 %v284, %v273
    %v286 = vrot.slane %v285, 4
    %v287 = vadd.f32 %v285, %v286
    %v288 = vrot.slane %v287, 2
    %v289 = vadd.f32 %v287, %v288
    %v290 = vrot.slane %v289, 1
    %v291 = vadd.f32 %v289, %v290
    %v292 = vld [vmem:[#allocation2] sm:$0x1]
    %294 = vset.pattern.permute.xlu0 0
    %295 = vperm.xlu0 %294, %v292
    %v296 = vpop.permute.xlu0 %295
    %v298 = vperm.slane %v296, 0
    %v299 = vadd.f32 %v282, %v298
    %v300 = vadd.f32 %v291, %v298
    %v301 = vxor.u32 %v299, 2147483648
    %v302 = vxor.u32 %v300, 2147483648
    %v303 = vmul.f32 %v301, 1.442695
    %v304 = vpow.pop %v303
    %v305 = vmul.f32 %v302, 1.442695
    %v306 = vpow.pop %v305
    %v307 = vadd.f32 %v304, 1.0
    %v308 = vadd.f32 %v306, 1.0
    %v309 = vrcp.pop %v307
    %v310 = vmul.f32 %v307, %v309
    %v311 = vsub.f32 1.0, %v310
    %v312 = vmul.f32 %v309, %v311
    %v313 = vadd.f32 %v309, %v312
    %vm314 = vweird.f32 %v307
    %vm315 = vweird.f32 %v309
    %vm316 = vmor %vm314, %vm315
    %v317 = vsel %vm316, %v309, %v313
    %v318 = vand.u32 2147483647, %v307
    %vm319 = vcmp.eq.f32.partialorder %v318, 8.507059e+37
    %v320 = vand.u32 %v307, 2147483648
    %v321 = vor.u32 1.1754944e-38, %v320
    %v322 = vsel %vm319, %v321, %v317
    %v323 = vmul.f32 1.0, %v322
    %v324 = vrcp.pop %v308
    %v325 = vmul.f32 %v308, %v324
    %v326 = vsub.f32 1.0, %v325
    %v327 = vmul.f32 %v324, %v326
    %v328 = vadd.f32 %v324, %v327
    %vm329 = vweird.f32 %v308
    %vm330 = vweird.f32 %v324
    %vm331 = vmor %vm329, %vm330
    %v332 = vsel %vm331, %v324, %v328
    %v333 = vand.u32 2147483647, %v308
    %vm334 = vcmp.eq.f32.partialorder %v333, 8.507059e+37
    %v335 = vand.u32 %v308, 2147483648
    %v336 = vor.u32 1.1754944e-38, %v335
    %v337 = vsel %vm334, %v336, %v332
    %v338 = vmul.f32 1.0, %v337
    %v341 = vrot.slane %v338, 7
    %vm342 = vcmask 1040384
    %v343 = vsel %vm342, %v323, %v341
    %v345 = vlaneseq
    %vm346 = vcmp.ge.s32.totalorder %v345, 0
    %vm347 = vcmp.lt.s32.totalorder %v345, 256
    %vm348 = vmand %vm346, %vm347
    %349 = vst.msk [vmem:[#allocation3] sm:$0x3] %vm348, %v343
    // Predicated region
    $region26: #{tpu_custom_call.1} parent=1 // pred_check
      _
    $region27: #{tpu_custom_call.1} parent=1 // pred_check_branch
      %351 = sbr.rel (0) target = $region29
    $region28: #{tpu_custom_call.1} parent=1 // pred_region
      %353 = vsyncadd [#allocation4], 0
      %s355 = sshll.u32 [#allocation3], 4
      %s356 = int_to_ptr.vmem [resolvable:$true] %s355
      %s357 = sshll.u32 %s6, 4
      %s358 = int_to_ptr.hbm [resolvable:$true] %s357
      %360 = dma.vmem_to_hbm [thread:$0]  %s356, 32, %s358, [#allocation4]
    $region29: #{tpu_custom_call.1} parent=1 // pred_fallthru
      _
    // Predicated region
    $region30: #{tpu_custom_call.1} parent=1 // pred_check
      _
    $region31: #{tpu_custom_call.1} parent=1 // pred_check_branch
      %362 = sbr.rel (0) target = $region33
    $region32: #{tpu_custom_call.1} parent=1 // pred_region
      %364 = dma.done [#allocation4], 32
    $region33: #{tpu_custom_call.1} parent=1 // pred_fallthru
      _
    %365 = vsyncpa [#allocation4], 1

</llo_original>
